<compile_context>
chip_gen: v7x
topology: tpu7x:2x2x1
jax: 0.10.0
libtpu: 0.0.40
codegen_flags: <defaults>
</compile_context>

<pallas_src>
import functools

import jax
import jax.numpy as jnp
from jax import lax
from jax.experimental import pallas as pl
from jax.experimental.pallas import tpu as pltpu


def _gcn_kernel(x_ref, adj_ref, w_ref, b_ref, out_ref, *, loop_val, add_loop):
    # x_ref  : (1, N, C_in)
    # adj_ref: (1, N, N)
    # w_ref  : (C_in, C_out)
    # b_ref  : (1, C_out)
    # out_ref: (1, N, C_out)
    adj = adj_ref[0].astype(jnp.float32)                      # (N, N)
    n = adj.shape[0]

    if add_loop:
        row = lax.broadcasted_iota(jnp.int32, (n, n), 0)
        col = lax.broadcasted_iota(jnp.int32, (n, n), 1)
        adj = jnp.where(row == col, jnp.float32(loop_val), adj)

    # D^-1/2 as a (N, 1) column: broadcasts over lanes, no transpose needed.
    deg = jnp.sum(adj, axis=-1, keepdims=True)                # (N, 1)
    dis = lax.rsqrt(jnp.maximum(deg, 1.0))                    # (N, 1)

    # Feature transform on the MXU.
    h = jnp.dot(x_ref[0].astype(jnp.float32), w_ref[...],
                preferred_element_type=jnp.float32)           # (N, C_out)

    # D^-1/2 A D^-1/2 H  ==  D^-1/2 (A (D^-1/2 H))
    h = dis * h
    agg = jnp.dot(adj, h, preferred_element_type=jnp.float32)  # (N, C_out)
    out = dis * agg + b_ref[...]                               # bias broadcast

    out_ref[0] = out.astype(out_ref.dtype)


def dense_gcn_conv(x, adj, weight, bias=None, *, improved=False,
                   add_loop=True, mask=None):
    """Pallas equivalent of DenseGCNConv.forward."""
    x = x.astype(jnp.float32)
    adj = adj.astype(jnp.float32)
    if x.ndim == 2:
        x = x[None]
    if adj.ndim == 2:
        adj = adj[None]

    B, N, _ = adj.shape
    C_in = x.shape[-1]
    C_out = weight.shape[-1]

    if bias is None:
        bias2d = jnp.zeros((1, C_out), dtype=jnp.float32)
    else:
        bias2d = bias.reshape(1, C_out).astype(jnp.float32)

    kernel = functools.partial(
        _gcn_kernel,
        loop_val=2.0 if improved else 1.0,
        add_loop=add_loop,
    )

    out = pl.pallas_call(
        kernel,
        out_shape=jax.ShapeDtypeStruct((B, N, C_out), jnp.float32),
        grid_spec=pltpu.PrefetchScalarGridSpec(
            num_scalar_prefetch=0,
            grid=(B,),
            in_specs=[
                pl.BlockSpec((1, N, C_in), lambda b: (b, 0, 0)),   # x
                pl.BlockSpec((1, N, N), lambda b: (b, 0, 0)),      # adj
                pl.BlockSpec((C_in, C_out), lambda b: (0, 0)),     # weight
                pl.BlockSpec((1, C_out), lambda b: (0, 0)),        # bias
            ],
            out_specs=pl.BlockSpec((1, N, C_out), lambda b: (b, 0, 0)),
        ),
        compiler_params=pltpu.CompilerParams(
            dimension_semantics=("parallel",),
        ),
    )(x, adj, weight.astype(jnp.float32), bias2d)

    if mask is not None:
        # Cheap elementwise post-multiply; kept in the wrapper (not used in demo).
        out = out * mask.reshape(B, N, 1).astype(out.dtype)
    return out


def dense_gcn_conv_ref(x, adj, weight, bias, *, improved=False, add_loop=True):
    """Pure-JAX reference mirroring the PyTorch module."""
    x = x.astype(jnp.float32)
    adj = adj.astype(jnp.float32)
    if x.ndim == 2:
        x = x[None]
    if adj.ndim == 2:
        adj = adj[None]
    B, N, _ = adj.shape
    if add_loop:
        eye = jnp.eye(N, dtype=bool)
        adj = jnp.where(eye[None], 2.0 if improved else 1.0, adj)
    out = jnp.matmul(x, weight)
    deg_inv_sqrt = jnp.maximum(adj.sum(-1), 1.0) ** -0.5
    adj = deg_inv_sqrt[..., :, None] * adj * deg_inv_sqrt[..., None, :]
    out = jnp.matmul(adj, out)
    if bias is not None:
        out = out + bias
    return out


if __name__ == "__main__":
    # Small but TPU-friendly shapes: N multiple of 8, C_out = 128 (lane-dense).
    B, N, C_IN, C_OUT = 2, 64, 32, 128

    key = jax.random.PRNGKey(0)
    k_x, k_a, k_w, k_b = jax.random.split(key, 4)

    x = jax.random.normal(k_x, (B, N, C_IN), dtype=jnp.float32)
    # Random symmetric-ish 0/1 adjacency (values just need to be valid floats).
    adj = (jax.random.uniform(k_a, (B, N, N)) > 0.7).astype(jnp.float32)
    # Glorot-style weight, nonzero bias to exercise the add path.
    limit = (6.0 / (C_IN + C_OUT)) ** 0.5
    weight = jax.random.uniform(k_w, (C_IN, C_OUT), minval=-limit, maxval=limit,
                                dtype=jnp.float32)
    bias = jax.random.normal(k_b, (C_OUT,), dtype=jnp.float32) * 0.1

    out = dense_gcn_conv(x, adj, weight, bias, improved=False, add_loop=True)
    out = jax.block_until_ready(out)

    ref = dense_gcn_conv_ref(x, adj, weight, bias, improved=False, add_loop=True)

    assert out.shape == (B, N, C_OUT)
    assert jnp.allclose(out, ref, atol=1e-4, rtol=1e-4), "mismatch vs reference"

    print("KERNEL_OK")
</pallas_src>

<mosaic_0001>
module attributes {stable_mosaic.version = 11 : i64} {
  func.func @_gcn_kernel(%arg0: i32, %arg1: memref<1x64x32xf32, #tpu.memory_space<vmem>>, %arg2: memref<1x64x64xf32, #tpu.memory_space<vmem>>, %arg3: memref<32x128xf32, #tpu.memory_space<vmem>>, %arg4: memref<1x128xf32, #tpu.memory_space<vmem>>, %arg5: memref<1x64x128xf32, #tpu.memory_space<vmem>>) attributes {dimension_semantics = [#tpu.dimension_semantics<parallel>], iteration_bounds = array<i64: 2>, scalar_prefetch = 0 : i64, scratch_operands = 0 : i64, tpu.core_type = #tpu.core_type<tc>, window_params = [{transform_indices = @transform_0, window_bounds = array<i64: 1, 64, 32>}, {transform_indices = @transform_1, window_bounds = array<i64: 1, 64, 64>}, {pipeline_mode = #tpu.pipeline_mode<synchronous>, transform_indices = @transform_2, window_bounds = array<i64: 32, 128>}, {pipeline_mode = #tpu.pipeline_mode<synchronous>, transform_indices = @transform_3, window_bounds = array<i64: 1, 128>}, {transform_indices = @transform_4, window_bounds = array<i64: 1, 64, 128>}]} {
    %c0 = arith.constant 0 : index
    %c0_0 = arith.constant 0 : index
    %c0_1 = arith.constant 0 : index
    %0 = vector.load %arg2[%c0, %c0_0, %c0_1] : memref<1x64x64xf32, #tpu.memory_space<vmem>>, vector<1x64x64xf32>
    %1 = vector.shape_cast %0 : vector<1x64x64xf32> to vector<64x64xf32>
    %2 = tpu.iota {dimensions = array<i32: 0>} : vector<64x64xi32>
    %3 = tpu.iota {dimensions = array<i32: 1>} : vector<64x64xi32>
    %4 = arith.cmpi eq, %2, %3 : vector<64x64xi32>
    %cst = arith.constant 1.000000e+00 : f32
    %5 = vector.broadcast %cst : f32 to vector<64x64xf32>
    %6 = arith.select %4, %5, %1 : vector<64x64xi1>, vector<64x64xf32>
    %cst_2 = arith.constant dense<0.000000e+00> : vector<64xf32>
    %7 = vector.multi_reduction <add>, %6, %cst_2 [1] : vector<64x64xf32> to vector<64xf32>
    %8 = vector.shape_cast %7 : vector<64xf32> to vector<64x1xf32>
    %cst_3 = arith.constant 1.000000e+00 : f32
    %9 = vector.broadcast %cst_3 : f32 to vector<64x1xf32>
    %10 = arith.maximumf %8, %9 : vector<64x1xf32>
    %11 = math.rsqrt %10 : vector<64x1xf32>
    %c0_4 = arith.constant 0 : index
    %c0_5 = arith.constant 0 : index
    %c0_6 = arith.constant 0 : index
    %12 = vector.load %arg1[%c0_4, %c0_5, %c0_6] : memref<1x64x32xf32, #tpu.memory_space<vmem>>, vector<1x64x32xf32>
    %13 = vector.shape_cast %12 : vector<1x64x32xf32> to vector<64x32xf32>
    %c0_7 = arith.constant 0 : index
    %c0_8 = arith.constant 0 : index
    %14 = vector.load %arg3[%c0_7, %c0_8] : memref<32x128xf32, #tpu.memory_space<vmem>>, vector<32x128xf32>
    %cst_9 = arith.constant dense<0.000000e+00> : vector<64x128xf32>
    %15 = tpu.matmul %13, %14, %cst_9 {dimension_numbers = #tpu.dot_dimension_numbers<[1], [0], [0], [1], [0, 0, 1, 1], [], []>} : vector<64x32xf32>, vector<32x128xf32>, vector<64x128xf32> -> vector<64x128xf32>
    %16 = vector.broadcast %11 : vector<64x1xf32> to vector<64x128xf32>
    %17 = arith.mulf %16, %15 : vector<64x128xf32>
    %cst_10 = arith.constant dense<0.000000e+00> : vector<64x128xf32>
    %18 = tpu.matmul %6, %17, %cst_10 {dimension_numbers = #tpu.dot_dimension_numbers<[1], [0], [0], [1], [0, 0, 1, 1], [], []>} : vector<64x64xf32>, vector<64x128xf32>, vector<64x128xf32> -> vector<64x128xf32>
    %19 = vector.broadcast %11 : vector<64x1xf32> to vector<64x128xf32>
    %20 = arith.mulf %19, %18 : vector<64x128xf32>
    %c0_11 = arith.constant 0 : index
    %c0_12 = arith.constant 0 : index
    %21 = vector.load %arg4[%c0_11, %c0_12] : memref<1x128xf32, #tpu.memory_space<vmem>>, vector<1x128xf32>
    %22 = vector.broadcast %21 : vector<1x128xf32> to vector<64x128xf32>
    %23 = arith.addf %20, %22 : vector<64x128xf32>
    %c0_13 = arith.constant 0 : index
    %c0_14 = arith.constant 0 : index
    %c0_15 = arith.constant 0 : index
    %24 = vector.load %arg5[%c0_13, %c0_14, %c0_15] : memref<1x64x128xf32, #tpu.memory_space<vmem>>, vector<1x64x128xf32>
    %25 = vector.shape_cast %24 : vector<1x64x128xf32> to vector<64x128xf32>
    %26 = vector.shape_cast %23 : vector<64x128xf32> to vector<1x64x128xf32>
    tpu.vector_store %arg5[%c0_13, %c0_14, %c0_15], %26 {strides = array<i32>} : memref<1x64x128xf32, #tpu.memory_space<vmem>>, vector<1x64x128xf32>,
    return
  }
  func.func @transform_0(%arg0: i32) -> (i32, i32, i32) {
    %c0_i32 = arith.constant 0 : i32
    %c0_i32_0 = arith.constant 0 : i32
    %c0_i32_1 = arith.constant 0 : i32
    return %arg0, %c0_i32, %c0_i32_0 : i32, i32, i32
  }
  func.func @transform_1(%arg0: i32) -> (i32, i32, i32) {
    %c0_i32 = arith.constant 0 : i32
    %c0_i32_0 = arith.constant 0 : i32
    %c0_i32_1 = arith.constant 0 : i32
    return %arg0, %c0_i32, %c0_i32_0 : i32, i32, i32
  }
  func.func @transform_2(%arg0: i32) -> (i32, i32) {
    %c0_i32 = arith.constant 0 : i32
    %c0_i32_0 = arith.constant 0 : i32
    %c0_i32_1 = arith.constant 0 : i32
    return %c0_i32, %c0_i32_0 : i32, i32
  }
  func.func @transform_3(%arg0: i32) -> (i32, i32) {
    %c0_i32 = arith.constant 0 : i32
    %c0_i32_0 = arith.constant 0 : i32
    %c0_i32_1 = arith.constant 0 : i32
    return %c0_i32, %c0_i32_0 : i32, i32
  }
  func.func @transform_4(%arg0: i32) -> (i32, i32, i32) {
    %c0_i32 = arith.constant 0 : i32
    %c0_i32_0 = arith.constant 0 : i32
    %c0_i32_1 = arith.constant 0 : i32
    return %arg0, %c0_i32, %c0_i32_0 : i32, i32, i32
  }
}

</mosaic_0001>

<llo_original>
// kernel: tpu_custom_call.1
$region0: #{tpu_custom_call.1}
  #allocation0 [shape = 'u32[]', space=smem, size = 0x4, offset = 0x4, fixed_abs, tag = 'smem constant byte address 0x4 - core index']
  #allocation1 [shape = 'u32[144,128]{1,0:T(1,128)}', space=vmem, size = 0x12000, scoped, tag = 'internal scratch']
  %s0 = inlined_call_operand.vmem [shape: f32[2,64,32], index: 0, kind: input, shape index: {}]
  %s1 = inlined_call_operand.vmem [shape: f32[2,64,64], index: 1, kind: input, shape index: {}]
  %s2 = inlined_call_operand.vmem [shape: f32[32,128], index: 2, kind: input, shape index: {}]
  %s3 = inlined_call_operand.vmem [shape: f32[1,128], index: 3, kind: input, shape index: {}]
  %s4 = inlined_call_operand.hbm [shape: f32[2,64,128], index: 4, kind: output, shape index: {}]
  %s5 = sld [smem:[#allocation0]]
  $region49: #{tpu_custom_call.1} parent=0
    _
  %s7 = ssub.s32 1, %s5
  %s8 = scalar_select 0, %s7, %s5
  $region1: #{tpu_custom_call.1} parent=0
    #allocation2 [shape = 'u8[65536]{0}', space=vmem, size = 0x10000, scoped, tag = 'output window, operand 0']
    #allocation3 [shape = 's32[2]{0}', space=sflag, size = 0x8, scoped, tag = 'scoped memory for tpu_custom_call.1']
    %9 = vsyncpa [#allocation3], 0
    %s10 = scalar_lea.sflag [#allocation3], 1
    %11 = vsyncpa %s10, 0
    loop: start=0, step=1, limit=4
    $region2: #{tpu_custom_call.1} parent=1 // loop_pre_header
      _
    $region3: #{tpu_custom_call.1} parent=1 // loop_header
      %s13 = sphi 0, %s17
      %p14 = scmp.ge.s32.totalorder %s13, 4
      %s23 = sphi 0, %s25
      %s26 = sphi 0, %s23
      %s27 = sphi 0, %s26
      %s43 = sphi 0, %s27
      %s49 = sphi 0, %s51
      %s52 = sphi 0, %s49
      %s53 = sphi 0, %s52
      %s69 = sphi 0, %s53
      %s73 = sphi 0, %s73
      %s75 = sphi 0, %s73
      %s76 = sphi 0, %s75
      %s90 = sphi 0, %s76
      %s94 = sphi 0, %s94
      %s96 = sphi 0, %s94
      %s97 = sphi 0, %s96
      %s111 = sphi 0, %s97
      %s117 = sphi 0, %s119
      %s120 = sphi 0, %s117
      %s121 = sphi 0, %s120
      %s137 = sphi 0, %s121
    $region4: #{tpu_custom_call.1} parent=1 // loop_header_branch
      %16 = sbr.rel (%p14) target = $region8
    $region5: #{tpu_custom_call.1} parent=1 // loop_body
      %s18 = ssub.s32 %s13, 1
      %s19 = ssub.s32 %s13, 2
      %s20 = sadd.s32 %s13, 1
      %s21 = ssub.s32 %s13, %s20
      %p22 = scmp.eq.s32.totalorder %s21, 0
      %s24 = sadd.s32 %s23, 1
      %s25 = scalar_select %p22, %s23, %s24
      %p28 = pneg %p22
      %p29 = scmp.eq.s32.totalorder %s13, 1
      %p30 = por %p28, %p29
      %p31 = scmp.ne.s32.totalorder %s23, %s26
      %p32 = scmp.eq.s32.totalorder %s13, 0
      %p33 = por %p31, %p32
      %p34 = scmp.ne.s32.totalorder %s23, %s26
      %p35 = scmp.eq.s32.totalorder %s18, 1
      %p36 = por %p34, %p35
      %p37 = scmp.ne.s32.totalorder %s26, %s27
      %p38 = scmp.eq.s32.totalorder %s18, 0
      %p39 = por %p37, %p38
      %p40 = scmp.ne.s32.totalorder %s26, %s27
      %p41 = scmp.eq.s32.totalorder %s19, 1
      %p42 = por %p40, %p41
      %p44 = scmp.ne.s32.totalorder %s27, %s43
      %p45 = scmp.eq.s32.totalorder %s19, 0
      %p46 = por %p44, %p45
      %s47 = ssub.s32 %s13, %s20
      %p48 = scmp.eq.s32.totalorder %s47, 0
      %s50 = sadd.s32 %s49, 1
      %s51 = scalar_select %p48, %s49, %s50
      %p54 = pneg %p48
      %p55 = scmp.eq.s32.totalorder %s13, 1
      %p56 = por %p54, %p55
      %p57 = scmp.ne.s32.totalorder %s49, %s52
      %p58 = scmp.eq.s32.totalorder %s13, 0
      %p59 = por %p57, %p58
      %p60 = scmp.ne.s32.totalorder %s49, %s52
      %p61 = scmp.eq.s32.totalorder %s18, 1
      %p62 = por %p60, %p61
      %p63 = scmp.ne.s32.totalorder %s52, %s53
      %p64 = scmp.eq.s32.totalorder %s18, 0
      %p65 = por %p63, %p64
      %p66 = scmp.ne.s32.totalorder %s52, %s53
      %p67 = scmp.eq.s32.totalorder %s19, 1
      %p68 = por %p66, %p67
      %p70 = scmp.ne.s32.totalorder %s53, %s69
      %p71 = scmp.eq.s32.totalorder %s19, 0
      %p72 = por %p70, %p71
      %s74 = sadd.s32 %s73, 1
      %p77 = scmp.eq.s32.totalorder %s13, 1
      %p78 = scmp.ne.s32.totalorder %s73, %s75
      %p79 = scmp.eq.s32.totalorder %s13, 0
      %p80 = por %p78, %p79
      %p81 = scmp.ne.s32.totalorder %s73, %s75
      %p82 = scmp.eq.s32.totalorder %s18, 1
      %p83 = por %p81, %p82
      %p84 = scmp.ne.s32.totalorder %s75, %s76
      %p85 = scmp.eq.s32.totalorder %s18, 0
      %p86 = por %p84, %p85
      %p87 = scmp.ne.s32.totalorder %s75, %s76
      %p88 = scmp.eq.s32.totalorder %s19, 1
      %p89 = por %p87, %p88
      %p91 = scmp.ne.s32.totalorder %s76, %s90
      %p92 = scmp.eq.s32.totalorder %s19, 0
      %p93 = por %p91, %p92
      %s95 = sadd.s32 %s94, 1
      %p98 = scmp.eq.s32.totalorder %s13, 1
      %p99 = scmp.ne.s32.totalorder %s94, %s96
      %p100 = scmp.eq.s32.totalorder %s13, 0
      %p101 = por %p99, %p100
      %p102 = scmp.ne.s32.totalorder %s94, %s96
      %p103 = scmp.eq.s32.totalorder %s18, 1
      %p104 = por %p102, %p103
      %p105 = scmp.ne.s32.totalorder %s96, %s97
      %p106 = scmp.eq.s32.totalorder %s18, 0
      %p107 = por %p105, %p106
      %p108 = scmp.ne.s32.totalorder %s96, %s97
      %p109 = scmp.eq.s32.totalorder %s19, 1
      %p110 = por %p108, %p109
      %p112 = scmp.ne.s32.totalorder %s97, %s111
      %p113 = scmp.eq.s32.totalorder %s19, 0
      %p114 = por %p112, %p113
      %s115 = ssub.s32 %s13, %s20
      %p116 = scmp.eq.s32.totalorder %s115, 0
      %s118 = sadd.s32 %s117, 1
      %s119 = scalar_select %p116, %s117, %s118
      %p122 = pneg %p116
      %p123 = scmp.eq.s32.totalorder %s13, 1
      %p124 = por %p122, %p123
      %p125 = scmp.ne.s32.totalorder %s117, %s120
      %p126 = scmp.eq.s32.totalorder %s13, 0
      %p127 = por %p125, %p126
      %p128 = scmp.ne.s32.totalorder %s117, %s120
      %p129 = scmp.eq.s32.totalorder %s18, 1
      %p130 = por %p128, %p129
      %p131 = scmp.ne.s32.totalorder %s120, %s121
      %p132 = scmp.eq.s32.totalorder %s18, 0
      %p133 = por %p131, %p132
      %p134 = scmp.ne.s32.totalorder %s120, %s121
      %p135 = scmp.eq.s32.totalorder %s19, 1
      %p136 = por %p134, %p135
      %p138 = scmp.ne.s32.totalorder %s121, %s137
      %p139 = scmp.eq.s32.totalorder %s19, 0
      %p140 = por %p138, %p139
      %p141 = scmp.le.s32.totalorder 1, %s13
      %p142 = scmp.lt.s32.totalorder %s13, 3
      %p143 = pnand %p141, %p142
      %p144 = pneg %p143
      // Predicated region
      $region9: #{tpu_custom_call.1} parent=5 // pred_check
        _
      $region10: #{tpu_custom_call.1} parent=5 // pred_check_branch
        %146 = sbr.rel (%p143) target = $region12
      $region11: #{tpu_custom_call.1} parent=5 // pred_region
        %s147 = ssub.s32 %s13, 1
        // Predicated region
        $region13: #{tpu_custom_call.1} parent=11 // pred_check
          %p148 = pneg %p86
        $region14: #{tpu_custom_call.1} parent=11 // pred_check_branch
          %150 = sbr.rel (%p148) target = $region16
        $region15: #{tpu_custom_call.1} parent=11 // pred_region
          _
        $region16: #{tpu_custom_call.1} parent=11 // pred_fallthru
          _
        // Predicated region
        $region17: #{tpu_custom_call.1} parent=11 // pred_check
          %p151 = pneg %p107
        $region18: #{tpu_custom_call.1} parent=11 // pred_check_branch
          %153 = sbr.rel (%p151) target = $region20
        $region19: #{tpu_custom_call.1} parent=11 // pred_region
          _
        $region20: #{tpu_custom_call.1} parent=11 // pred_fallthru
          _
      $region12: #{tpu_custom_call.1} parent=5 // pred_fallthru
        _
      %p154 = scmp.lt.s32.totalorder %s13, 2
      // Predicated region
      $region21: #{tpu_custom_call.1} parent=5 // pred_check
        %p155 = pneg %p154
      $region22: #{tpu_custom_call.1} parent=5 // pred_check_branch
        %157 = sbr.rel (%p155) target = $region24
      $region23: #{tpu_custom_call.1} parent=5 // pred_region
        // Predicated region
        $region25: #{tpu_custom_call.1} parent=23 // pred_check
          %p158 = pneg %p33
        $region26: #{tpu_custom_call.1} parent=23 // pred_check_branch
          %160 = sbr.rel (%p158) target = $region28
        $region27: #{tpu_custom_call.1} parent=23 // pred_region
          %p161 = scmp.lt.s32.totalorder %s13, 1
          %s162 = scalar_select %p161, %s13, 1
          %s163 = smul.addr %s162, 8
          %s164 = smul.addr %s163, 8
          %s165 = scalar_lea.vmem %s0, %s164
        $region28: #{tpu_custom_call.1} parent=23 // pred_fallthru
          _
        // Predicated region
        $region29: #{tpu_custom_call.1} parent=23 // pred_check
          %p166 = pneg %p59
        $region30: #{tpu_custom_call.1} parent=23 // pred_check_branch
          %168 = sbr.rel (%p166) target = $region32
        $region31: #{tpu_custom_call.1} parent=23 // pred_region
          %p169 = scmp.lt.s32.totalorder %s13, 1
          %s170 = scalar_select %p169, %s13, 1
          %s171 = smul.addr %s170, 8
          %s172 = smul.addr %s171, 8
          %s173 = scalar_lea.vmem %s1, %s172
        $region32: #{tpu_custom_call.1} parent=23 // pred_fallthru
          _
      $region24: #{tpu_custom_call.1} parent=5 // pred_fallthru
        _
      %p174 = scmp.le.s32.totalorder 1, %s13
      %p175 = scmp.lt.s32.totalorder %s13, 3
      %p176 = pnand %p174, %p175
      %p177 = pneg %p176
      // Predicated region
      $region33: #{tpu_custom_call.1} parent=5 // pred_check
        _
      $region34: #{tpu_custom_call.1} parent=5 // pred_check_branch
        %179 = sbr.rel (%p176) target = $region36
      $region35: #{tpu_custom_call.1} parent=5 // pred_region
        %s180 = ssub.s32 %s13, 1
        %p181 = scmp.lt.s32.totalorder %s18, 1
        %s182 = scalar_select %p181, %s18, 1
        %s183 = smul.addr %s182, 8
        %s184 = smul.addr %s183, 8
        %s185 = scalar_lea.vmem %s0, %s184
        %p186 = pneg %p39
        %p187 = pneg %p36
        %p188 = scmp.lt.s32.totalorder %s18, 1
        %s189 = scalar_select %p188, %s18, 1
        %s190 = smul.addr %s189, 8
        %s191 = smul.addr %s190, 8
        %s192 = scalar_lea.vmem %s1, %s191
        %p193 = pneg %p65
        %p194 = pneg %p62
        %p195 = pneg %p86
        %p196 = pneg %p83
        %p197 = pneg %p107
        %p198 = pneg %p104
        %p199 = pneg %p133
        %p200 = pneg %p130
        %s201 = sand.u32 %s120, 1
        %s202 = scalar_lea.sflag [#allocation3], %s201
        %s203 = sand.u32 %s120, 1
        %s204 = smul.addr %s203, 64
        %s205 = scalar_lea.vmem [#allocation2], %s204
        %p206 = scmp.lt.s32.totalorder %s18, 1
        %s207 = scalar_select %p206, %s18, 1
        %s208 = smul.addr %s207, 8
        %s209 = smul.addr %s208, 8
        %s210 = scalar_lea.vmem %s0, %s209
        %p211 = scmp.lt.s32.totalorder %s18, 1
        %s212 = scalar_select %p211, %s18, 1
        %s213 = smul.addr %s212, 8
        %s214 = smul.addr %s213, 8
        %s215 = scalar_lea.vmem %s1, %s214
        %v216 = vld [vmem:[%s215] sm:$0xff]
        %v217 = vld [vmem:[%s215 + $0x8] sm:$0xff]
        %v218 = vld [vmem:[%s215 + $0x10] sm:$0xff]
        %v219 = vld [vmem:[%s215 + $0x18] sm:$0xff]
        %v220 = vld [vmem:[%s215 + $0x20] sm:$0xff]
        %v221 = vld [vmem:[%s215 + $0x28] sm:$0xff]
        %v222 = vld [vmem:[%s215 + $0x30] sm:$0xff]
        %v223 = vld [vmem:[%s215 + $0x38] sm:$0xff]
        %v224 = vlaneseq
        %v225 = vshrl.u32 %v224, 7
        %v226 = vadd.s32 %v225, 8
        %v227 = vadd.s32 %v225, 16
        %v228 = vadd.s32 %v225, 24
        %v229 = vadd.s32 %v225, 32
        %v230 = vadd.s32 %v225, 40
        %v231 = vadd.s32 %v225, 48
        %v232 = vadd.s32 %v225, 56
        %v233 = vlaneseq
        %v234 = vand.u32 %v233, 127
        %vm235 = vcmp.eq.s32.totalorder %v225, %v234
        %vm236 = vcmp.eq.s32.totalorder %v226, %v234
        %vm237 = vcmp.eq.s32.totalorder %v227, %v234
        %vm238 = vcmp.eq.s32.totalorder %v228, %v234
        %vm239 = vcmp.eq.s32.totalorder %v229, %v234
        %vm240 = vcmp.eq.s32.totalorder %v230, %v234
        %vm241 = vcmp.eq.s32.totalorder %v231, %v234
        %vm242 = vcmp.eq.s32.totalorder %v232, %v234
        %v243 = vsel %vm235, 1.0, %v216
        %v244 = vsel %vm236, 1.0, %v217
        %v245 = vsel %vm237, 1.0, %v218
        %v246 = vsel %vm238, 1.0, %v219
        %v247 = vsel %vm239, 1.0, %v220
        %v248 = vsel %vm240, 1.0, %v221
        %v249 = vsel %vm241, 1.0, %v222
        %v250 = vsel %vm242, 1.0, %v223
        %vm251 = vcmask 523264
        %v252 = vsel %vm251, %v243, 0.0
        %253 = vadd.xlane.f32.xlu0 %v252
        %v254 = vpop.xlane.xlu0 %253
        %v255 = vsel %vm251, %v244, 0.0
        %256 = vadd.xlane.f32.xlu0 %v255
        %v257 = vpop.xlane.xlu0 %256
        %v258 = vsel %vm251, %v245, 0.0
        %259 = vadd.xlane.f32.xlu0 %v258
        %v260 = vpop.xlane.xlu0 %259
        %v261 = vsel %vm251, %v246, 0.0
        %262 = vadd.xlane.f32.xlu0 %v261
        %v263 = vpop.xlane.xlu0 %262
        %v264 = vsel %vm251, %v247, 0.0
        %265 = vadd.xlane.f32.xlu0 %v264
        %v266 = vpop.xlane.xlu0 %265
        %v267 = vsel %vm251, %v248, 0.0
        %268 = vadd.xlane.f32.xlu0 %v267
        %v269 = vpop.xlane.xlu0 %268
        %v270 = vsel %vm251, %v249, 0.0
        %271 = vadd.xlane.f32.xlu0 %v270
        %v272 = vpop.xlane.xlu0 %271
        %v273 = vsel %vm251, %v250, 0.0
        %274 = vadd.xlane.f32.xlu0 %v273
        %v275 = vpop.xlane.xlu0 %274
        %v276 = vmax.f32 %v254, 1.0
        %v277 = vmax.f32 %v257, 1.0
        %v278 = vmax.f32 %v260, 1.0
        %v279 = vmax.f32 %v263, 1.0
        %v280 = vmax.f32 %v266, 1.0
        %v281 = vmax.f32 %v269, 1.0
        %v282 = vmax.f32 %v272, 1.0
        %v283 = vmax.f32 %v275, 1.0
        %v284 = vrsqrt.pop %v276
        %v285 = vrsqrt.pop %v277
        %v286 = vrsqrt.pop %v278
        %v287 = vrsqrt.pop %v279
        %v288 = vrsqrt.pop %v280
        %v289 = vrsqrt.pop %v281
        %v290 = vrsqrt.pop %v282
        %v291 = vrsqrt.pop %v283
        %v292 = vld [vmem:[%s210] sm:$0xff]
        %v293 = vld [vmem:[%s210 + $0x8] sm:$0xff]
        %v294 = vld [vmem:[%s210 + $0x10] sm:$0xff]
        %v295 = vld [vmem:[%s210 + $0x18] sm:$0xff]
        %v296 = vld [vmem:[%s210 + $0x20] sm:$0xff]
        %v297 = vld [vmem:[%s210 + $0x28] sm:$0xff]
        %v298 = vld [vmem:[%s210 + $0x30] sm:$0xff]
        %v299 = vld [vmem:[%s210 + $0x38] sm:$0xff]
        %v300 = vld [vmem:[%s2] sm:$0xff]
        %v301 = vld [vmem:[%s2 + $0x8] sm:$0xff]
        %v302 = vld [vmem:[%s2 + $0x10] sm:$0xff]
        %v303 = vld [vmem:[%s2 + $0x18] sm:$0xff]
        %vm304 = vcmask 261120
        %v306 = vsel %vm304, %v292, 0
        %v309 = vsel %vm304, %v293, 0
        %v312 = vsel %vm304, %v294, 0
        %v315 = vsel %vm304, %v295, 0
        %v318 = vsel %vm304, %v296, 0
        %v321 = vsel %vm304, %v297, 0
        %v324 = vsel %vm304, %v298, 0
        %v327 = vsel %vm304, %v299, 0
        %329 = vmatprep.subr.mxu0 0.0
        %330 = vmatpush1.msra.mxu0 %v300
        %331 = vmatprep.subr.mxu0 0.0
        %332 = vmatpush1.msra.mxu0 %v301
        %333 = vmatprep.subr.mxu0 0.0
        %334 = vmatpush1.msra.mxu0 %v302
        %335 = vmatprep.subr.mxu0 0.0
        %336 = vmatpush1.msra.mxu0 %v303
        %337 = vmatprep.subr.mxu0 0.0
        %338 = vmatpush1.msra.mxu0 0.0
        %339 = vmatprep.subr.mxu0 0.0
        %340 = vmatpush1.msra.mxu0 0.0
        %341 = vmatprep.subr.mxu0 0.0
        %342 = vmatpush1.msra.mxu0 0.0
        %343 = vmatprep.subr.mxu0 0.0
        %344 = vmatpush1.msra.mxu0 0.0
        %345 = vmatprep.subr.mxu0 0.0
        %346 = vmatpush1.msra.mxu0 0.0
        %347 = vmatprep.subr.mxu0 0.0
        %348 = vmatpush1.msra.mxu0 0.0
        %349 = vmatprep.subr.mxu0 0.0
        %350 = vmatpush1.msra.mxu0 0.0
        %351 = vmatprep.subr.mxu0 0.0
        %352 = vmatpush1.msra.mxu0 0.0
        %353 = vmatprep.subr.mxu0 0.0
        %354 = vmatpush1.msra.mxu0 0.0
        %355 = vmatprep.subr.mxu0 0.0
        %356 = vmatpush1.msra.mxu0 0.0
        %357 = vmatprep.subr.mxu0 0.0
        %358 = vmatpush1.msra.mxu0 0.0
        %359 = vmatprep.subr.mxu0 0.0
        %360 = vmatpush1.msra.mxu0 0.0
        %361 = vmatprep.subr.mxu0 0.0
        %362 = vmatpush1.msra.mxu0 0.0
        %363 = vmatprep.subr.mxu0 0.0
        %364 = vmatpush1.msra.mxu0 0.0
        %365 = vmatprep.subr.mxu0 0.0
        %366 = vmatpush1.msra.mxu0 0.0
        %367 = vmatprep.subr.mxu0 0.0
        %368 = vmatpush1.msra.mxu0 0.0
        %369 = vmatprep.subr.mxu0 0.0
        %370 = vmatpush1.msra.mxu0 0.0
        %371 = vmatprep.subr.mxu0 0.0
        %372 = vmatpush1.msra.mxu0 0.0
        %373 = vmatprep.subr.mxu0 0.0
        %374 = vmatpush1.msra.mxu0 0.0
        %375 = vmatprep.subr.mxu0 0.0
        %376 = vmatpush1.msra.mxu0 0.0
        %377 = vmatprep.subr.mxu0 0.0
        %378 = vmatpush1.msra.mxu0 0.0
        %379 = vmatprep.subr.mxu0 0.0
        %380 = vmatpush1.msra.mxu0 0.0
        %381 = vmatprep.subr.mxu0 0.0
        %382 = vmatpush1.msra.mxu0 0.0
        %383 = vmatprep.subr.mxu0 0.0
        %384 = vmatpush1.msra.mxu0 0.0
        %385 = vmatprep.subr.mxu0 0.0
        %386 = vmatpush1.msra.mxu0 0.0
        %387 = vmatprep.subr.mxu0 0.0
        %388 = vmatpush1.msra.mxu0 0.0
        %389 = vmatprep.subr.mxu0 0.0
        %390 = vmatpush1.msra.mxu0 0.0
        %391 = vmatprep.subr.mxu0 0.0
        %392 = vmatpush1.msra.mxu0 0.0
        %393 = vmatprep.mubr.f32.mxu0 0.0
        %394 = vmatmul.mubr.f32.gmra.mrb[0].mxu0 %v306
        %v395 = vpop.f32.mrb[0].mxu0
        %v396 = vadd.f32 0.0, %v395
        %v397 = vpop.f32.mrb[0].mxu0
        %398 = vmatprep.mubr.f32.mxu0 0.0
        %399 = vmatmul.mubr.f32.gmra.mrb[0].mxu0 %v309
        %v400 = vpop.f32.mrb[0].mxu0
        %v401 = vadd.f32 0.0, %v400
        %v402 = vpop.f32.mrb[0].mxu0
        %403 = vmatprep.mubr.f32.mxu0 0.0
        %404 = vmatmul.mubr.f32.gmra.mrb[0].mxu0 %v312
        %v405 = vpop.f32.mrb[0].mxu0
        %v406 = vadd.f32 0.0, %v405
        %v407 = vpop.f32.mrb[0].mxu0
        %408 = vmatprep.mubr.f32.mxu0 0.0
        %409 = vmatmul.mubr.f32.gmra.mrb[0].mxu0 %v315
        %v410 = vpop.f32.mrb[0].mxu0
        %v411 = vadd.f32 0.0, %v410
        %v412 = vpop.f32.mrb[0].mxu0
        %413 = vmatprep.mubr.f32.mxu0 0.0
        %414 = vmatmul.mubr.f32.gmra.mrb[0].mxu0 %v318
        %v415 = vpop.f32.mrb[0].mxu0
        %v416 = vadd.f32 0.0, %v415
        %v417 = vpop.f32.mrb[0].mxu0
        %418 = vmatprep.mubr.f32.mxu0 0.0
        %419 = vmatmul.mubr.f32.gmra.mrb[0].mxu0 %v321
        %v420 = vpop.f32.mrb[0].mxu0
        %v421 = vadd.f32 0.0, %v420
        %v422 = vpop.f32.mrb[0].mxu0
        %423 = vmatprep.mubr.f32.mxu0 0.0
        %424 = vmatmul.mubr.f32.gmra.mrb[0].mxu0 %v324
        %v425 = vpop.f32.mrb[0].mxu0
        %v426 = vadd.f32 0.0, %v425
        %v427 = vpop.f32.mrb[0].mxu0
        %428 = vmatprep.mubr.f32.mxu0 0.0
        %429 = vmatmul.mubr.f32.gmra.mrb[0].mxu0 %v327
        %v430 = vpop.f32.mrb[0].mxu0
        %v431 = vadd.f32 0.0, %v430
        %v432 = vpop.f32.mrb[0].mxu0
        %433 = vdwg.mxu0
        %v434 = vmul.f32 %v284, %v396
        %v435 = vmul.f32 %v285, %v401
        %v436 = vmul.f32 %v286, %v406
        %v437 = vmul.f32 %v287, %v411
        %v438 = vmul.f32 %v288, %v416
        %v439 = vmul.f32 %v289, %v421
        %v440 = vmul.f32 %v290, %v426
        %v441 = vmul.f32 %v291, %v431
        %v443 = vsel %vm251, %v243, 0
        %v446 = vsel %vm251, %v244, 0
        %v449 = vsel %vm251, %v245, 0
        %v452 = vsel %vm251, %v246, 0
        %v455 = vsel %vm251, %v247, 0
        %v458 = vsel %vm251, %v248, 0
        %v461 = vsel %vm251, %v249, 0
        %v464 = vsel %vm251, %v250, 0
        %466 = vmatprep.subr.mxu0 0.0
        %467 = vmatpush1.msra.mxu0 %v434
        %468 = vmatprep.subr.mxu0 0.0
        %469 = vmatpush1.msra.mxu0 %v435
        %470 = vmatprep.subr.mxu0 0.0
        %471 = vmatpush1.msra.mxu0 %v436
        %472 = vmatprep.subr.mxu0 0.0
        %473 = vmatpush1.msra.mxu0 %v437
        %474 = vmatprep.subr.mxu0 0.0
        %475 = vmatpush1.msra.mxu0 %v438
        %476 = vmatprep.subr.mxu0 0.0
        %477 = vmatpush1.msra.mxu0 %v439
        %478 = vmatprep.subr.mxu0 0.0
        %479 = vmatpush1.msra.mxu0 %v440
        %480 = vmatprep.subr.mxu0 0.0
        %481 = vmatpush1.msra.mxu0 %v441
        %482 = vmatprep.subr.mxu0 0.0
        %483 = vmatpush1.msra.mxu0 0.0
        %484 = vmatprep.subr.mxu0 0.0
        %485 = vmatpush1.msra.mxu0 0.0
        %486 = vmatprep.subr.mxu0 0.0
        %487 = vmatpush1.msra.mxu0 0.0
        %488 = vmatprep.subr.mxu0 0.0
        %489 = vmatpush1.msra.mxu0 0.0
        %490 = vmatprep.subr.mxu0 0.0
        %491 = vmatpush1.msra.mxu0 0.0
        %492 = vmatprep.subr.mxu0 0.0
        %493 = vmatpush1.msra.mxu0 0.0
        %494 = vmatprep.subr.mxu0 0.0
        %495 = vmatpush1.msra.mxu0 0.0
        %496 = vmatprep.subr.mxu0 0.0
        %497 = vmatpush1.msra.mxu0 0.0
        %498 = vmatprep.subr.mxu0 0.0
        %499 = vmatpush1.msra.mxu0 0.0
        %500 = vmatprep.subr.mxu0 0.0
        %501 = vmatpush1.msra.mxu0 0.0
        %502 = vmatprep.subr.mxu0 0.0
        %503 = vmatpush1.msra.mxu0 0.0
        %504 = vmatprep.subr.mxu0 0.0
        %505 = vmatpush1.msra.mxu0 0.0
        %506 = vmatprep.subr.mxu0 0.0
        %507 = vmatpush1.msra.mxu0 0.0
        %508 = vmatprep.subr.mxu0 0.0
        %509 = vmatpush1.msra.mxu0 0.0
        %510 = vmatprep.subr.mxu0 0.0
        %511 = vmatpush1.msra.mxu0 0.0
        %512 = vmatprep.subr.mxu0 0.0
        %513 = vmatpush1.msra.mxu0 0.0
        %514 = vmatprep.subr.mxu0 0.0
        %515 = vmatpush1.msra.mxu0 0.0
        %516 = vmatprep.subr.mxu0 0.0
        %517 = vmatpush1.msra.mxu0 0.0
        %518 = vmatprep.subr.mxu0 0.0
        %519 = vmatpush1.msra.mxu0 0.0
        %520 = vmatprep.subr.mxu0 0.0
        %521 = vmatpush1.msra.mxu0 0.0
        %522 = vmatprep.subr.mxu0 0.0
        %523 = vmatpush1.msra.mxu0 0.0
        %524 = vmatprep.subr.mxu0 0.0
        %525 = vmatpush1.msra.mxu0 0.0
        %526 = vmatprep.subr.mxu0 0.0
        %527 = vmatpush1.msra.mxu0 0.0
        %528 = vmatprep.subr.mxu0 0.0
        %529 = vmatpush1.msra.mxu0 0.0
        %530 = vmatprep.mubr.f32.mxu0 0.0
        %531 = vmatmul.mubr.f32.gmra.mrb[0].mxu0 %v443
        %v532 = vpop.f32.mrb[0].mxu0
        %v533 = vadd.f32 0.0, %v532
        %v534 = vpop.f32.mrb[0].mxu0
        %535 = vmatprep.mubr.f32.mxu0 0.0
        %536 = vmatmul.mubr.f32.gmra.mrb[0].mxu0 %v446
        %v537 = vpop.f32.mrb[0].mxu0
        %v538 = vadd.f32 0.0, %v537
        %v539 = vpop.f32.mrb[0].mxu0
        %540 = vmatprep.mubr.f32.mxu0 0.0
        %541 = vmatmul.mubr.f32.gmra.mrb[0].mxu0 %v449
        %v542 = vpop.f32.mrb[0].mxu0
        %v543 = vadd.f32 0.0, %v542
        %v544 = vpop.f32.mrb[0].mxu0
        %545 = vmatprep.mubr.f32.mxu0 0.0
        %546 = vmatmul.mubr.f32.gmra.mrb[0].mxu0 %v452
        %v547 = vpop.f32.mrb[0].mxu0
        %v548 = vadd.f32 0.0, %v547
        %v549 = vpop.f32.mrb[0].mxu0
        %550 = vmatprep.mubr.f32.mxu0 0.0
        %551 = vmatmul.mubr.f32.gmra.mrb[0].mxu0 %v455
        %v552 = vpop.f32.mrb[0].mxu0
        %v553 = vadd.f32 0.0, %v552
        %v554 = vpop.f32.mrb[0].mxu0
        %555 = vmatprep.mubr.f32.mxu0 0.0
        %556 = vmatmul.mubr.f32.gmra.mrb[0].mxu0 %v458
        %v557 = vpop.f32.mrb[0].mxu0
        %v558 = vadd.f32 0.0, %v557
        %v559 = vpop.f32.mrb[0].mxu0
        %560 = vmatprep.mubr.f32.mxu0 0.0
        %561 = vmatmul.mubr.f32.gmra.mrb[0].mxu0 %v461
        %v562 = vpop.f32.mrb[0].mxu0
        %v563 = vadd.f32 0.0, %v562
        %v564 = vpop.f32.mrb[0].mxu0
        %565 = vmatprep.mubr.f32.mxu0 0.0
        %566 = vmatmul.mubr.f32.gmra.mrb[0].mxu0 %v464
        %v567 = vpop.f32.mrb[0].mxu0
        %v568 = vadd.f32 0.0, %v567
        %v569 = vpop.f32.mrb[0].mxu0
        %570 = vdwg.mxu0
        %v571 = vmul.f32 %v284, %v533
        %v572 = vmul.f32 %v285, %v538
        %v573 = vmul.f32 %v286, %v543
        %v574 = vmul.f32 %v287, %v548
        %v575 = vmul.f32 %v288, %v553
        %v576 = vmul.f32 %v289, %v558
        %v577 = vmul.f32 %v290, %v563
        %v578 = vmul.f32 %v291, %v568
        %v579 = vld [vmem:[%s3] sm:$0x1]
        %v581 = vlaneseq
        %v582 = vshrl.u32 %v581, 7
        %v583 = vsub.s32 0, %v582
        %v584 = vrot.slane %v579, %v583
        %v586 = vadd.f32 %v571, %v584
        %v587 = vadd.f32 %v572, %v584
        %v588 = vadd.f32 %v573, %v584
        %v589 = vadd.f32 %v574, %v584
        %v590 = vadd.f32 %v575, %v584
        %v591 = vadd.f32 %v576, %v584
        %v592 = vadd.f32 %v577, %v584
        %v593 = vadd.f32 %v578, %v584
        %594 = vst [vmem:[%s205] sm:$0xff] %v586
        %595 = vst [vmem:[%s205 + $0x8] sm:$0xff] %v587
        %596 = vst [vmem:[%s205 + $0x10] sm:$0xff] %v588
        %597 = vst [vmem:[%s205 + $0x18] sm:$0xff] %v589
        %598 = vst [vmem:[%s205 + $0x20] sm:$0xff] %v590
        %599 = vst [vmem:[%s205 + $0x28] sm:$0xff] %v591
        %600 = vst [vmem:[%s205 + $0x30] sm:$0xff] %v592
        %601 = vst [vmem:[%s205 + $0x38] sm:$0xff] %v593
        %s602 = sand.u32 %s120, 1
        %s603 = scalar_lea.sflag [#allocation3], %s602
        %s604 = sand.u32 %s120, 1
        %s605 = smul.addr %s604, 64
        %s606 = scalar_lea.vmem [#allocation2], %s605
        // Predicated region
        $region37: #{tpu_custom_call.1} parent=35 // pred_check
          %p607 = pneg %p130
        $region38: #{tpu_custom_call.1} parent=35 // pred_check_branch
          %609 = sbr.rel (%p607) target = $region40
        $region39: #{tpu_custom_call.1} parent=35 // pred_region
          %s611 = ssub.s32 1024, 1024
          %612 = vsyncadd %s603, %s611
          %s613 = smul.addr %s18, 8
          %s614 = smul.addr %s613, 128
          %s615 = scalar_lea.hbm %s4, %s614
          %s616 = sshll.u32 %s606, 4
          %s617 = int_to_ptr.vmem [resolvable:$true] %s616
          %622 = dma.vmem_to_hbm [thread:$0]  %s617, 1024, %s615, %s603, 128, 128, 8
        $region40: #{tpu_custom_call.1} parent=35 // pred_fallthru
          _
      $region36: #{tpu_custom_call.1} parent=5 // pred_fallthru
        _
      %p623 = scmp.le.s32.totalorder 2, %s13
      // Predicated region
      $region41: #{tpu_custom_call.1} parent=5 // pred_check
        %p624 = pneg %p623
      $region42: #{tpu_custom_call.1} parent=5 // pred_check_branch
        %626 = sbr.rel (%p624) target = $region44
      $region43: #{tpu_custom_call.1} parent=5 // pred_region
        %s627 = ssub.s32 %s13, 2
        // Predicated region
        $region45: #{tpu_custom_call.1} parent=43 // pred_check
          %p628 = pneg %p136
        $region46: #{tpu_custom_call.1} parent=43 // pred_check_branch
          %630 = sbr.rel (%p628) target = $region48
        $region47: #{tpu_custom_call.1} parent=43 // pred_region
          %s631 = sand.u32 %s121, 1
          %s632 = scalar_lea.sflag [#allocation3], %s631
          %s633 = sand.u32 %s121, 1
          %s634 = smul.addr %s633, 64
          %s635 = scalar_lea.vmem [#allocation2], %s634
          %636 = dma.done %s632, 1024
        $region48: #{tpu_custom_call.1} parent=43 // pred_fallthru
          _
      $region44: #{tpu_custom_call.1} parent=5 // pred_fallthru
        _
    $region6: #{tpu_custom_call.1} parent=1 // loop_footer
      %s17 = sadd.s32 1, %s13
    $region7: #{tpu_custom_call.1} parent=1 // loop_footer_branch
      %12 = sbr.rel target = $region3
    $region8: #{tpu_custom_call.1} parent=1 // loop_exit
      _
    %637 = vsyncpa [#allocation3], 1
    %s638 = scalar_lea.sflag [#allocation3], 1
    %639 = vsyncpa %s638, 1

</llo_original>
